<compile_context>
chip_gen: v7x
topology: tpu7x:2x2x1
jax: 0.10.0
libtpu: 0.0.40
codegen_flags: <defaults>
</compile_context>

<pallas_src>
import functools

import jax
import jax.numpy as jnp
from jax.experimental import pallas as pl
from jax.experimental.pallas import tpu as pltpu


def _head_kernel(x_ref, wkqv_ref, o_ref, *, scale, batch, seq, head_size):
    # x_ref:    (B*T, C)   bf16  (batch folded into sublanes)
    # wkqv_ref: (C, 3H)    bf16  (columns: [Wk | Wq | Wv])
    # o_ref:    (B, T, H)  f32
    B, T, H = batch, seq, head_size

    # --- Fused QKV projection: (B*T, C) @ (C, 3H), f32 accumulation on MXU ---
    kqv = jnp.dot(x_ref[...], wkqv_ref[...],
                  preferred_element_type=jnp.float32)        # (B*T, 3H) f32
    kqv = kqv.reshape(B, T, 3 * H)

    k = kqv[:, :, 0 * H:1 * H].astype(jnp.bfloat16)          # (B, T, H)
    # Fold C**-0.5 into q while still f32 (B*T*H mul, cheaper than B*T*T).
    q = (kqv[:, :, 1 * H:2 * H] * scale).astype(jnp.bfloat16)
    v = kqv[:, :, 2 * H:3 * H].astype(jnp.bfloat16)          # (B, T, H)

    # --- Scores: q @ k^T (contract last dims; batched; no explicit transpose) ---
    s = jax.lax.dot_general(
        q, k,
        dimension_numbers=(((2,), (2,)), ((0,), (0,))),
        preferred_element_type=jnp.float32)                  # (B, T, T) f32

    # --- Causal mask: col <= row allowed, else -inf ---
    row = jax.lax.broadcasted_iota(jnp.int32, (T, T), 0)
    col = jax.lax.broadcasted_iota(jnp.int32, (T, T), 1)
    s = jnp.where(col <= row, s, -jnp.inf)

    # --- Numerically stable softmax; reciprocal on the EUP slot ---
    m = jnp.max(s, axis=-1, keepdims=True)
    e = jnp.exp(s - m)
    denom = jnp.sum(e, axis=-1, keepdims=True)
    p = e * pl.reciprocal(denom, approx=True)                # (B, T, T)

    # --- out = p @ v (batched, bf16 operands, f32 accumulation) ---
    out = jax.lax.dot_general(
        p.astype(jnp.bfloat16), v,
        dimension_numbers=(((2,), (1,)), ((0,), (0,))),
        preferred_element_type=jnp.float32)                  # (B, T, H)
    o_ref[...] = out.astype(o_ref.dtype)


def head_forward(x, wk, wq, wv):
    """Single attention head (causal), eval-mode dropout (identity).

    x:  (B, T, C) float32
    wk, wq, wv: (C, H) float32  (already transposed from PyTorch's (H, C))
    returns: (B, T, H) float32
    """
    B, T, C = x.shape
    H = wk.shape[1]
    scale = float(C) ** -0.5   # NOTE: module uses C**-0.5 (not head_size**-0.5)

    # Fuse the three projection weights into one (C, 3H) matrix and cast the
    # matmul operands to bf16 (f32 accumulation happens inside the kernel).
    wkqv = jnp.concatenate([wk, wq, wv], axis=1).astype(jnp.bfloat16)
    x_bf16 = x.astype(jnp.bfloat16).reshape(B * T, C)   # fold batch into sublanes

    kernel = functools.partial(
        _head_kernel, scale=scale, batch=B, seq=T, head_size=H)

    # Single invocation: whole problem lives in VMEM (tiny), no grid loop.
    return pl.pallas_call(
        kernel,
        out_shape=jax.ShapeDtypeStruct((B, T, H), jnp.float32),
        in_specs=[
            pl.BlockSpec(memory_space=pltpu.MemorySpace.VMEM),   # x (B*T, C)
            pl.BlockSpec(memory_space=pltpu.MemorySpace.VMEM),   # fused Wkqv
        ],
        out_specs=pl.BlockSpec(memory_space=pltpu.MemorySpace.VMEM),
    )(x_bf16, wkqv)


def head_reference(x, wk, wq, wv):
    """Plain-JAX f32 reference for correctness checking."""
    B, T, C = x.shape
    k = x @ wk
    q = x @ wq
    v = x @ wv
    wei = jnp.einsum("btd,bsd->bts", q, k) * (C ** -0.5)
    mask = jnp.tril(jnp.ones((T, T), dtype=bool))
    wei = jnp.where(mask, wei, -jnp.inf)
    wei = jax.nn.softmax(wei, axis=-1)
    return wei @ v


if __name__ == "__main__":
    # Hyper-parameters implied by the module: N_EMBED, BLOCK_SIZE, head_size, dropout.
    B = 2            # batch
    BLOCK_SIZE = 8   # sequence length T
    N_EMBED = 32     # embedding dim C
    HEAD_SIZE = 16   # head_size H
    DROPOUT = 0.0    # eval-mode / no dropout

    key = jax.random.PRNGKey(0)
    kx, kk, kq, kv = jax.random.split(key, 4)

    x = jax.random.normal(kx, (B, BLOCK_SIZE, N_EMBED), dtype=jnp.float32)
    # nn.Linear(N_EMBED, head_size, bias=False) weight is (H, C); store transposed (C, H).
    wk = (jax.random.normal(kk, (HEAD_SIZE, N_EMBED), dtype=jnp.float32)
          * (N_EMBED ** -0.5)).T
    wq = (jax.random.normal(kq, (HEAD_SIZE, N_EMBED), dtype=jnp.float32)
          * (N_EMBED ** -0.5)).T
    wv = (jax.random.normal(kv, (HEAD_SIZE, N_EMBED), dtype=jnp.float32)
          * (N_EMBED ** -0.5)).T

    out = head_forward(x, wk, wq, wv)
    out = jax.block_until_ready(out)

    ref = head_reference(x, wk, wq, wv)
    assert out.shape == (B, BLOCK_SIZE, HEAD_SIZE), out.shape
    # bf16 matmul operands + approx reciprocal -> loose-but-safe tolerance vs f32 ref.
    assert jnp.allclose(out, ref, atol=5e-2, rtol=5e-2), "mismatch vs reference"

    print("KERNEL_OK")
</pallas_src>

<mosaic_0001>
module attributes {stable_mosaic.version = 11 : i64} {
  func.func @_head_kernel(%arg0: memref<16x32xbf16, #tpu.memory_space<vmem>>, %arg1: memref<32x48xbf16, #tpu.memory_space<vmem>>, %arg2: memref<2x8x16xf32, #tpu.memory_space<vmem>>) attributes {dimension_semantics = [], scalar_prefetch = 0 : i64, scratch_operands = 0 : i64, tpu.core_type = #tpu.core_type<tc>} {
    %c0 = arith.constant 0 : index
    %c0_0 = arith.constant 0 : index
    %0 = vector.load %arg0[%c0, %c0_0] : memref<16x32xbf16, #tpu.memory_space<vmem>>, vector<16x32xbf16>
    %c0_1 = arith.constant 0 : index
    %c0_2 = arith.constant 0 : index
    %1 = vector.load %arg1[%c0_1, %c0_2] : memref<32x48xbf16, #tpu.memory_space<vmem>>, vector<32x48xbf16>
    %cst = arith.constant dense<0.000000e+00> : vector<16x48xf32>
    %2 = tpu.matmul %0, %1, %cst {dimension_numbers = #tpu.dot_dimension_numbers<[1], [0], [0], [1], [0, 0, 1, 1], [], []>} : vector<16x32xbf16>, vector<32x48xbf16>, vector<16x48xf32> -> vector<16x48xf32>
    %3 = vector.shape_cast %2 : vector<16x48xf32> to vector<2x8x48xf32>
    %4 = vector.extract_strided_slice %3 {offsets = [0, 0, 0], sizes = [2, 8, 16], strides = [1, 1, 1]} : vector<2x8x48xf32> to vector<2x8x16xf32>
    %5 = arith.truncf %4 : vector<2x8x16xf32> to vector<2x8x16xbf16>
    %6 = vector.extract_strided_slice %3 {offsets = [0, 0, 16], sizes = [2, 8, 16], strides = [1, 1, 1]} : vector<2x8x48xf32> to vector<2x8x16xf32>
    %cst_3 = arith.constant 0.176776692 : f32
    %7 = vector.broadcast %cst_3 : f32 to vector<2x8x16xf32>
    %8 = arith.mulf %6, %7 : vector<2x8x16xf32>
    %9 = arith.truncf %8 : vector<2x8x16xf32> to vector<2x8x16xbf16>
    %10 = vector.extract_strided_slice %3 {offsets = [0, 0, 32], sizes = [2, 8, 16], strides = [1, 1, 1]} : vector<2x8x48xf32> to vector<2x8x16xf32>
    %11 = arith.truncf %10 : vector<2x8x16xf32> to vector<2x8x16xbf16>
    %cst_4 = arith.constant dense<0.000000e+00> : vector<2x8x8xf32>
    %12 = tpu.matmul %9, %5, %cst_4 {dimension_numbers = #tpu.dot_dimension_numbers<[2], [2], [1], [1], [0, 0, 0, 1, 1, 1], [0], [0]>} : vector<2x8x16xbf16>, vector<2x8x16xbf16>, vector<2x8x8xf32> -> vector<2x8x8xf32>
    %13 = tpu.iota {dimensions = array<i32: 0>} : vector<8x8xi32>
    %14 = tpu.iota {dimensions = array<i32: 1>} : vector<8x8xi32>
    %15 = arith.cmpi sle, %14, %13 : vector<8x8xi32>
    %cst_5 = arith.constant 0xFF800000 : f32
    %16 = vector.shape_cast %15 : vector<8x8xi1> to vector<1x8x8xi1>
    %17 = vector.broadcast %16 : vector<1x8x8xi1> to vector<2x8x8xi1>
    %18 = vector.broadcast %cst_5 : f32 to vector<2x8x8xf32>
    %19 = arith.select %17, %12, %18 : vector<2x8x8xi1>, vector<2x8x8xf32>
    %cst_6 = arith.constant dense<0xFF800000> : vector<2x8xf32>
    %20 = vector.multi_reduction <maximumf>, %19, %cst_6 [2] : vector<2x8x8xf32> to vector<2x8xf32>
    %21 = vector.shape_cast %20 : vector<2x8xf32> to vector<2x8x1xf32>
    %22 = vector.broadcast %21 : vector<2x8x1xf32> to vector<2x8x8xf32>
    %23 = arith.subf %19, %22 : vector<2x8x8xf32>
    %24 = math.exp %23 : vector<2x8x8xf32>
    %cst_7 = arith.constant dense<0.000000e+00> : vector<2x8xf32>
    %25 = vector.multi_reduction <add>, %24, %cst_7 [2] : vector<2x8x8xf32> to vector<2x8xf32>
    %26 = vector.shape_cast %25 : vector<2x8xf32> to vector<2x8x1xf32>
    %27 = tpu.reciprocal %26 {approx = true} : vector<2x8x1xf32> -> vector<2x8x1xf32>
    %28 = vector.broadcast %27 : vector<2x8x1xf32> to vector<2x8x8xf32>
    %29 = arith.mulf %24, %28 : vector<2x8x8xf32>
    %30 = arith.truncf %29 : vector<2x8x8xf32> to vector<2x8x8xbf16>
    %cst_8 = arith.constant dense<0.000000e+00> : vector<2x8x16xf32>
    %31 = tpu.matmul %30, %11, %cst_8 {dimension_numbers = #tpu.dot_dimension_numbers<[2], [1], [1], [2], [0, 0, 0, 1, 1, 2], [0], [0]>} : vector<2x8x8xbf16>, vector<2x8x16xbf16>, vector<2x8x16xf32> -> vector<2x8x16xf32>
    %c0_9 = arith.constant 0 : index
    %c0_10 = arith.constant 0 : index
    %c0_11 = arith.constant 0 : index
    %32 = vector.load %arg2[%c0_9, %c0_10, %c0_11] : memref<2x8x16xf32, #tpu.memory_space<vmem>>, vector<2x8x16xf32>
    tpu.vector_store %arg2[%c0_9, %c0_10, %c0_11], %31 {strides = array<i32>} : memref<2x8x16xf32, #tpu.memory_space<vmem>>, vector<2x8x16xf32>,
    return
  }
}

</mosaic_0001>

<llo_original>
// kernel: tpu_custom_call.1
$region0: #{tpu_custom_call.1}
  #allocation0 [shape = 'u32[]', space=smem, size = 0x4, offset = 0x4, fixed_abs, tag = 'smem constant byte address 0x4 - core index']
  #allocation1 [shape = 'u32[144,128]{1,0:T(1,128)}', space=vmem, size = 0x12000, scoped, tag = 'internal scratch']
  %s0 = inlined_call_operand.hbm [shape: bf16[16,32], index: 0, kind: input, shape index: {}]
  %s1 = inlined_call_operand.hbm [shape: bf16[32,48], index: 1, kind: input, shape index: {}]
  %s2 = inlined_call_operand.hbm [shape: f32[2,8,16], index: 2, kind: output, shape index: {}]
  %s3 = sld [smem:[#allocation0]]
  $region26: #{tpu_custom_call.1} parent=0
    _
  %s5 = ssub.s32 1, %s3
  %s6 = scalar_select 0, %s5, %s3
  $region1: #{tpu_custom_call.1} parent=0
    #allocation2 [shape = 'u8[4096]{0}', space=vmem, size = 0x1000, scoped, tag = 'input window, operand 0, single buffered']
    #allocation3 [shape = 's32[1]{0}', space=sflag, size = 0x4, scoped, tag = 'scoped memory for tpu_custom_call.1']
    #allocation4 [shape = 's32[1]{0}', space=sflag, size = 0x4, scoped, tag = 'scoped memory for tpu_custom_call.1']
    #allocation5 [shape = 'u8[8192]{0}', space=vmem, size = 0x2000, scoped, tag = 'input window, operand 1, single buffered']
    #allocation6 [shape = 's32[1]{0}', space=sflag, size = 0x4, scoped, tag = 'scoped memory for tpu_custom_call.1']
    #allocation7 [shape = 'u8[8192]{0}', space=vmem, size = 0x2000, scoped, tag = 'output window, operand 0, single buffered']
    %7 = vsyncpa [#allocation3], 0
    %8 = vsyncpa [#allocation6], 0
    %9 = vsyncpa [#allocation4], 0
    // Predicated region
    $region2: #{tpu_custom_call.1} parent=1 // pred_check
      _
    $region3: #{tpu_custom_call.1} parent=1 // pred_check_branch
      %11 = sbr.rel (0) target = $region5
    $region4: #{tpu_custom_call.1} parent=1 // pred_region
      %s13 = ssub.s32 128, 128
      %14 = vsyncadd [#allocation3], %s13
      %s15 = sshll.u32 [#allocation2], 4
      %s16 = int_to_ptr.vmem [resolvable:$true] %s15
      %21 = dma.hbm_to_vmem [thread:$0]  %s0, 128, %s16, [#allocation3], 64, 64, 4
    $region5: #{tpu_custom_call.1} parent=1 // pred_fallthru
      _
    // Predicated region
    $region6: #{tpu_custom_call.1} parent=1 // pred_check
      _
    $region7: #{tpu_custom_call.1} parent=1 // pred_check_branch
      %23 = sbr.rel (0) target = $region9
    $region8: #{tpu_custom_call.1} parent=1 // pred_region
      %s25 = ssub.s32 256, 256
      %26 = vsyncadd [#allocation6], %s25
      %s27 = sshll.u32 [#allocation5], 4
      %s28 = int_to_ptr.vmem [resolvable:$true] %s27
      %33 = dma.hbm_to_vmem [thread:$0]  %s1, 256, %s28, [#allocation6], 64, 64, 4
    $region9: #{tpu_custom_call.1} parent=1 // pred_fallthru
      _
    // Predicated region
    $region10: #{tpu_custom_call.1} parent=1 // pred_check
      _
    $region11: #{tpu_custom_call.1} parent=1 // pred_check_branch
      %35 = sbr.rel (0) target = $region13
    $region12: #{tpu_custom_call.1} parent=1 // pred_region
      %36 = dma.done [#allocation3], 128
    $region13: #{tpu_custom_call.1} parent=1 // pred_fallthru
      _
    // Predicated region
    $region14: #{tpu_custom_call.1} parent=1 // pred_check
      _
    $region15: #{tpu_custom_call.1} parent=1 // pred_check_branch
      %38 = sbr.rel (0) target = $region17
    $region16: #{tpu_custom_call.1} parent=1 // pred_region
      %39 = dma.done [#allocation6], 256
    $region17: #{tpu_custom_call.1} parent=1 // pred_fallthru
      _
    %v41 = vld [vmem:[#allocation2] sm:$0xf]
    %v42 = vld [vmem:[#allocation2 + $0x4] sm:$0xf]
    %v43 = vld [vmem:[#allocation5] sm:$0xf]
    %v44 = vld [vmem:[#allocation5 + $0x4] sm:$0xf]
    %v45 = vld [vmem:[#allocation5 + $0x8] sm:$0xf]
    %v46 = vld [vmem:[#allocation5 + $0xc] sm:$0xf]
    %v49 = vunpack.c.l.b16 %v41
    %v50 = vunpack.c.l.b16 %v42
    %v51 = vpack.c.b16 %v50, %v49
    %v56 = vunpack.c.l.b16 %v43
    %v57 = vunpack.c.l.b16 %v44
    %v58 = vunpack.c.l.b16 %v45
    %v59 = vunpack.c.l.b16 %v46
    %v60 = vpack.c.b16 %v57, %v56
    %v61 = vpack.c.b16 %v59, %v58
    %vm64 = vcmask 261120
    %v66 = vsel %vm64, %v51, 0
    %68 = vmatprep.subr.bf16.mxu0 0
    %69 = vmatpush1.bf16.msra.mxu0 %v60
    %70 = vmatprep.subr.bf16.mxu0 0
    %71 = vmatpush1.bf16.msra.mxu0 %v61
    %72 = vmatprep.subr.bf16.mxu0 0
    %73 = vmatpush1.bf16.msra.mxu0 0
    %74 = vmatprep.subr.bf16.mxu0 0
    %75 = vmatpush1.bf16.msra.mxu0 0
    %76 = vmatprep.subr.bf16.mxu0 0
    %77 = vmatpush1.bf16.msra.mxu0 0
    %78 = vmatprep.subr.bf16.mxu0 0
    %79 = vmatpush1.bf16.msra.mxu0 0
    %80 = vmatprep.subr.bf16.mxu0 0
    %81 = vmatpush1.bf16.msra.mxu0 0
    %82 = vmatprep.subr.bf16.mxu0 0
    %83 = vmatpush1.bf16.msra.mxu0 0
    %84 = vmatprep.subr.bf16.mxu0 0
    %85 = vmatpush1.bf16.msra.mxu0 0
    %86 = vmatprep.subr.bf16.mxu0 0
    %87 = vmatpush1.bf16.msra.mxu0 0
    %88 = vmatprep.subr.bf16.mxu0 0
    %89 = vmatpush1.bf16.msra.mxu0 0
    %90 = vmatprep.subr.bf16.mxu0 0
    %91 = vmatpush1.bf16.msra.mxu0 0
    %92 = vmatprep.subr.bf16.mxu0 0
    %93 = vmatpush1.bf16.msra.mxu0 0
    %94 = vmatprep.subr.bf16.mxu0 0
    %95 = vmatpush1.bf16.msra.mxu0 0
    %96 = vmatprep.subr.bf16.mxu0 0
    %97 = vmatpush1.bf16.msra.mxu0 0
    %98 = vmatprep.subr.bf16.mxu0 0
    %99 = vmatpush1.bf16.msra.mxu0 0
    %100 = vmatprep.mubr.bf16.mxu0 0
    %101 = vmatmul.mubr.bf16.gmra.mrb[0].mxu0 %v66
    %v102 = vpop.f32.mrb[0].mxu0
    %v103 = vadd.f32 0.0, %v102
    %v104 = vpop.f32.mrb[0].mxu0
    %v105 = vpop.f32.mrb[0].mxu0
    %v106 = vadd.f32 0.0, %v105
    %v107 = vpop.f32.mrb[0].mxu0
    %108 = vdwg.mxu0
    %v109 = vpack.c.bf16 %v103, %v103
    %v110 = vpack.c.bf16 %v106, %v106
    %v111 = vmul.f32 %v103, 0.17677669
    %v112 = vmul.f32 %v106, 0.17677669
    %v113 = vpack.c.bf16 %v111, %v111
    %v114 = vpack.c.bf16 %v112, %v112
    %116 = vrot.lane.b32.xlu0 %v113, 112
    %v117 = vpop.permute.xlu0 %116
    %vm118 = vcmask 130048
    %v120 = vsel %vm118, %v117, 0
    %v123 = vsel %vm118, %v109, 0
    %125 = vmatprep.subr.bf16.mxu0 0
    %126 = vmatpush1.bf16.xpose.msra.mxu0 %v123
    %127 = vmatprep.subr.bf16.mxu0 0
    %128 = vmatpush1.bf16.xpose.msra.mxu0 0
    %129 = vmatprep.subr.bf16.mxu0 0
    %130 = vmatpush1.bf16.xpose.msra.mxu0 0
    %131 = vmatprep.subr.bf16.mxu0 0
    %132 = vmatpush1.bf16.xpose.msra.mxu0 0
    %133 = vmatprep.subr.bf16.mxu0 0
    %134 = vmatpush1.bf16.xpose.msra.mxu0 0
    %135 = vmatprep.subr.bf16.mxu0 0
    %136 = vmatpush1.bf16.xpose.msra.mxu0 0
    %137 = vmatprep.subr.bf16.mxu0 0
    %138 = vmatpush1.bf16.xpose.msra.mxu0 0
    %139 = vmatprep.subr.bf16.mxu0 0
    %140 = vmatpush1.bf16.xpose.msra.mxu0 0
    %141 = vmatprep.subr.bf16.mxu0 0
    %142 = vmatpush1.bf16.xpose.msra.mxu0 0
    %143 = vmatprep.subr.bf16.mxu0 0
    %144 = vmatpush1.bf16.xpose.msra.mxu0 0
    %145 = vmatprep.subr.bf16.mxu0 0
    %146 = vmatpush1.bf16.xpose.msra.mxu0 0
    %147 = vmatprep.subr.bf16.mxu0 0
    %148 = vmatpush1.bf16.xpose.msra.mxu0 0
    %149 = vmatprep.subr.bf16.mxu0 0
    %150 = vmatpush1.bf16.xpose.msra.mxu0 0
    %151 = vmatprep.subr.bf16.mxu0 0
    %152 = vmatpush1.bf16.xpose.msra.mxu0 0
    %153 = vmatprep.subr.bf16.mxu0 0
    %154 = vmatpush1.bf16.xpose.msra.mxu0 0
    %155 = vmatprep.subr.bf16.mxu0 0
    %156 = vmatpush1.bf16.xpose.msra.mxu0 0
    %157 = vmatprep.mubr.bf16.mxu0 0
    %158 = vmatmul.mubr.bf16.gmra.mrb[0].mxu0 %v120
    %v159 = vpop.f32.mrb[0].mxu0
    %v160 = vadd.f32 0.0, %v159
    %v161 = vpop.f32.mrb[0].mxu0
    %v162 = vpop.f32.mrb[0].mxu0
    %v163 = vpop.f32.mrb[0].mxu0
    %164 = vdwg.mxu0
    %166 = vrot.lane.b32.xlu0 %v114, 112
    %v167 = vpop.permute.xlu0 %166
    %v169 = vsel %vm118, %v167, 0
    %v172 = vsel %vm118, %v110, 0
    %174 = vmatprep.subr.bf16.mxu0 0
    %175 = vmatpush1.bf16.xpose.msra.mxu0 %v172
    %176 = vmatprep.subr.bf16.mxu0 0
    %177 = vmatpush1.bf16.xpose.msra.mxu0 0
    %178 = vmatprep.subr.bf16.mxu0 0
    %179 = vmatpush1.bf16.xpose.msra.mxu0 0
    %180 = vmatprep.subr.bf16.mxu0 0
    %181 = vmatpush1.bf16.xpose.msra.mxu0 0
    %182 = vmatprep.subr.bf16.mxu0 0
    %183 = vmatpush1.bf16.xpose.msra.mxu0 0
    %184 = vmatprep.subr.bf16.mxu0 0
    %185 = vmatpush1.bf16.xpose.msra.mxu0 0
    %186 = vmatprep.subr.bf16.mxu0 0
    %187 = vmatpush1.bf16.xpose.msra.mxu0 0
    %188 = vmatprep.subr.bf16.mxu0 0
    %189 = vmatpush1.bf16.xpose.msra.mxu0 0
    %190 = vmatprep.subr.bf16.mxu0 0
    %191 = vmatpush1.bf16.xpose.msra.mxu0 0
    %192 = vmatprep.subr.bf16.mxu0 0
    %193 = vmatpush1.bf16.xpose.msra.mxu0 0
    %194 = vmatprep.subr.bf16.mxu0 0
    %195 = vmatpush1.bf16.xpose.msra.mxu0 0
    %196 = vmatprep.subr.bf16.mxu0 0
    %197 = vmatpush1.bf16.xpose.msra.mxu0 0
    %198 = vmatprep.subr.bf16.mxu0 0
    %199 = vmatpush1.bf16.xpose.msra.mxu0 0
    %200 = vmatprep.subr.bf16.mxu0 0
    %201 = vmatpush1.bf16.xpose.msra.mxu0 0
    %202 = vmatprep.subr.bf16.mxu0 0
    %203 = vmatpush1.bf16.xpose.msra.mxu0 0
    %204 = vmatprep.subr.bf16.mxu0 0
    %205 = vmatpush1.bf16.xpose.msra.mxu0 0
    %206 = vmatprep.mubr.bf16.mxu0 0
    %207 = vmatmul.mubr.bf16.gmra.mrb[0].mxu0 %v169
    %v208 = vpop.f32.mrb[0].mxu0
    %v209 = vadd.f32 0.0, %v208
    %v210 = vpop.f32.mrb[0].mxu0
    %v211 = vpop.f32.mrb[0].mxu0
    %v212 = vpop.f32.mrb[0].mxu0
    %213 = vdwg.mxu0
    %v214 = vlaneseq
    %v215 = vshrl.u32 %v214, 7
    %v216 = vlaneseq
    %v217 = vand.u32 %v216, 127
    %vm218 = vcmp.le.s32.totalorder %v217, %v215
    %v219 = vsel %vm218, 1, 0
    %vm220 = vcmp.eq.s32.totalorder %v219, 1
    %v221 = vsel %vm220, %v160, -inf
    %v222 = vsel %vm220, %v209, -inf
    %vm223 = vcmask 64512
    %v224 = vsel %vm223, %v221, -inf
    %225 = vmax.xlane.f32.xlu0 %v224
    %v226 = vpop.xlane.xlu0 %225
    %v227 = vsel %vm223, %v222, -inf
    %228 = vmax.xlane.f32.xlu0 %v227
    %v229 = vpop.xlane.xlu0 %228
    %v230 = vsub.f32 %v221, %v226
    %v231 = vsub.f32 %v222, %v229
    %v232 = vmul.f32 %v230, 1.442695
    %v233 = vpow.pop %v232
    %v234 = vmul.f32 %v231, 1.442695
    %v235 = vpow.pop %v234
    %v236 = vsel %vm223, %v233, 0.0
    %237 = vadd.xlane.f32.xlu0 %v236
    %v238 = vpop.xlane.xlu0 %237
    %v239 = vsel %vm223, %v235, 0.0
    %240 = vadd.xlane.f32.xlu0 %v239
    %v241 = vpop.xlane.xlu0 %240
    %v242 = vrcp.pop %v238
    %v243 = vrcp.pop %v241
    %v244 = vmul.f32 %v233, %v242
    %v245 = vmul.f32 %v235, %v243
    %v246 = vpack.c.bf16 %v244, %v244
    %v247 = vpack.c.bf16 %v245, %v245
    %249 = vrot.lane.b32.xlu0 %v109, 96
    %v250 = vpop.permute.xlu0 %249
    %v252 = vsel %vm223, %v246, 0
    %vm254 = vcmask 1043456
    %v256 = vsel %vm254, %v250, 0
    %258 = vmatprep.subr.bf16.mxu0 0
    %259 = vmatpush1.bf16.msra.mxu0 %v256
    %260 = vmatprep.subr.bf16.mxu0 0
    %261 = vmatpush1.bf16.msra.mxu0 0
    %262 = vmatprep.subr.bf16.mxu0 0
    %263 = vmatpush1.bf16.msra.mxu0 0
    %264 = vmatprep.subr.bf16.mxu0 0
    %265 = vmatpush1.bf16.msra.mxu0 0
    %266 = vmatprep.subr.bf16.mxu0 0
    %267 = vmatpush1.bf16.msra.mxu0 0
    %268 = vmatprep.subr.bf16.mxu0 0
    %269 = vmatpush1.bf16.msra.mxu0 0
    %270 = vmatprep.subr.bf16.mxu0 0
    %271 = vmatpush1.bf16.msra.mxu0 0
    %272 = vmatprep.subr.bf16.mxu0 0
    %273 = vmatpush1.bf16.msra.mxu0 0
    %274 = vmatprep.subr.bf16.mxu0 0
    %275 = vmatpush1.bf16.msra.mxu0 0
    %276 = vmatprep.subr.bf16.mxu0 0
    %277 = vmatpush1.bf16.msra.mxu0 0
    %278 = vmatprep.subr.bf16.mxu0 0
    %279 = vmatpush1.bf16.msra.mxu0 0
    %280 = vmatprep.subr.bf16.mxu0 0
    %281 = vmatpush1.bf16.msra.mxu0 0
    %282 = vmatprep.subr.bf16.mxu0 0
    %283 = vmatpush1.bf16.msra.mxu0 0
    %284 = vmatprep.subr.bf16.mxu0 0
    %285 = vmatpush1.bf16.msra.mxu0 0
    %286 = vmatprep.subr.bf16.mxu0 0
    %287 = vmatpush1.bf16.msra.mxu0 0
    %288 = vmatprep.subr.bf16.mxu0 0
    %289 = vmatpush1.bf16.msra.mxu0 0
    %290 = vmatprep.mubr.bf16.mxu0 0
    %291 = vmatmul.mubr.bf16.gmra.mrb[0].mxu0 %v252
    %v292 = vpop.f32.mrb[0].mxu0
    %v293 = vadd.f32 0.0, %v292
    %v294 = vpop.f32.mrb[0].mxu0
    %v295 = vpop.f32.mrb[0].mxu0
    %v296 = vpop.f32.mrb[0].mxu0
    %297 = vdwg.mxu0
    %299 = vrot.lane.b32.xlu0 %v110, 96
    %v300 = vpop.permute.xlu0 %299
    %v302 = vsel %vm223, %v247, 0
    %v305 = vsel %vm254, %v300, 0
    %307 = vmatprep.subr.bf16.mxu0 0
    %308 = vmatpush1.bf16.msra.mxu0 %v305
    %309 = vmatprep.subr.bf16.mxu0 0
    %310 = vmatpush1.bf16.msra.mxu0 0
    %311 = vmatprep.subr.bf16.mxu0 0
    %312 = vmatpush1.bf16.msra.mxu0 0
    %313 = vmatprep.subr.bf16.mxu0 0
    %314 = vmatpush1.bf16.msra.mxu0 0
    %315 = vmatprep.subr.bf16.mxu0 0
    %316 = vmatpush1.bf16.msra.mxu0 0
    %317 = vmatprep.subr.bf16.mxu0 0
    %318 = vmatpush1.bf16.msra.mxu0 0
    %319 = vmatprep.subr.bf16.mxu0 0
    %320 = vmatpush1.bf16.msra.mxu0 0
    %321 = vmatprep.subr.bf16.mxu0 0
    %322 = vmatpush1.bf16.msra.mxu0 0
    %323 = vmatprep.subr.bf16.mxu0 0
    %324 = vmatpush1.bf16.msra.mxu0 0
    %325 = vmatprep.subr.bf16.mxu0 0
    %326 = vmatpush1.bf16.msra.mxu0 0
    %327 = vmatprep.subr.bf16.mxu0 0
    %328 = vmatpush1.bf16.msra.mxu0 0
    %329 = vmatprep.subr.bf16.mxu0 0
    %330 = vmatpush1.bf16.msra.mxu0 0
    %331 = vmatprep.subr.bf16.mxu0 0
    %332 = vmatpush1.bf16.msra.mxu0 0
    %333 = vmatprep.subr.bf16.mxu0 0
    %334 = vmatpush1.bf16.msra.mxu0 0
    %335 = vmatprep.subr.bf16.mxu0 0
    %336 = vmatpush1.bf16.msra.mxu0 0
    %337 = vmatprep.subr.bf16.mxu0 0
    %338 = vmatpush1.bf16.msra.mxu0 0
    %339 = vmatprep.mubr.bf16.mxu0 0
    %340 = vmatmul.mubr.bf16.gmra.mrb[0].mxu0 %v302
    %v341 = vpop.f32.mrb[0].mxu0
    %v342 = vadd.f32 0.0, %v341
    %v343 = vpop.f32.mrb[0].mxu0
    %v344 = vpop.f32.mrb[0].mxu0
    %v345 = vpop.f32.mrb[0].mxu0
    %346 = vdwg.mxu0
    %347 = vst.msk [vmem:[#allocation7] sm:$0xff] %vm118, %v293
    %348 = vst.msk [vmem:[#allocation7 + $0x8] sm:$0xff] %vm118, %v342
    // Predicated region
    $region18: #{tpu_custom_call.1} parent=1 // pred_check
      _
    $region19: #{tpu_custom_call.1} parent=1 // pred_check_branch
      %350 = sbr.rel (0) target = $region21
    $region20: #{tpu_custom_call.1} parent=1 // pred_region
      %s352 = ssub.s32 256, 256
      %353 = vsyncadd [#allocation4], %s352
      %s354 = sshll.u32 [#allocation7], 4
      %s355 = int_to_ptr.vmem [resolvable:$true] %s354
      %360 = dma.vmem_to_hbm [thread:$0]  %s355, 256, %s2, [#allocation4], 128, 128, 8
    $region21: #{tpu_custom_call.1} parent=1 // pred_fallthru
      _
    // Predicated region
    $region22: #{tpu_custom_call.1} parent=1 // pred_check
      _
    $region23: #{tpu_custom_call.1} parent=1 // pred_check_branch
      %362 = sbr.rel (0) target = $region25
    $region24: #{tpu_custom_call.1} parent=1 // pred_region
      %363 = dma.done [#allocation4], 256
    $region25: #{tpu_custom_call.1} parent=1 // pred_fallthru
      _
    %364 = vsyncpa [#allocation3], 1
    %365 = vsyncpa [#allocation6], 1
    %366 = vsyncpa [#allocation4], 1

</llo_original>
